<compile_context>
chip_gen: v6e
topology: v6e:2x2x1
jax: 0.10.0
libtpu: 0.0.40
codegen_flags: <defaults>
</compile_context>

<pallas_src>
import jax
import jax.numpy as jnp
from jax.experimental import pallas as pl
from jax.experimental.pallas import tpu as pltpu


# ----------------------------------------------------------------------------
# Case 1: plain tensor -> t[-1]   (tiled, pipelined HBM->HBM copy)
# ----------------------------------------------------------------------------
def _take_last_tensor_kernel(t_ref, out_ref):
    # t_ref block is (1, tb, td): a tile of the last time step.
    out_ref[...] = t_ref[0]


def take_last_tensor(t, *, tb_max=512, td_max=1024):
    orig_shape = t.shape
    T = orig_shape[0]

    # Normalize to (T, B, D): keep the last dim lane-dense, flatten the rest.
    if t.ndim == 1:
        t3 = t.reshape(T, 1, 1)
    elif t.ndim == 2:
        t3 = t.reshape(T, 1, orig_shape[1])
    else:
        t3 = t.reshape(T, -1, orig_shape[-1])
    _, B, D = t3.shape

    # Tile sizes: either the full dim (small case) or an (8,128)-aligned tile.
    tb = B if B <= tb_max else (tb_max // 8) * 8
    td = D if D <= td_max else (td_max // 128) * 128

    grid = (pl.cdiv(B, tb), pl.cdiv(D, td))
    out = pl.pallas_call(
        _take_last_tensor_kernel,
        out_shape=jax.ShapeDtypeStruct((B, D), t.dtype),
        grid=grid,
        in_specs=[pl.BlockSpec((1, tb, td), lambda i, j: (T - 1, i, j))],
        out_specs=pl.BlockSpec((tb, td), lambda i, j: (i, j)),
        compiler_params=pltpu.CompilerParams(
            dimension_semantics=("parallel", "parallel")),
    )(t3)
    return out.reshape(orig_shape[1:])


# ----------------------------------------------------------------------------
# Case 2: SequenceCat -> data[cumsum(lengths) - 1]
# Batched manual-DMA gather with cross-step double buffering: on step i we
# issue the G row DMAs for step i+1 (indices read from the prefetched SMEM
# table) before waiting on step i's DMAs, then do one dense, sublane-aligned
# (G, D) store of the gathered block.
# ----------------------------------------------------------------------------
_GATHER_ROWS = 8  # one full sublane group per output store


def _gather_last_kernel(idx_ref, data_hbm, out_ref, buf, sem):
    G = _GATHER_ROWS
    step = pl.program_id(0)
    nsteps = pl.num_programs(0)
    slot = step & 1

    def issue(s, sl):
        base = s * G
        for g in range(G):
            row = idx_ref[base + g]
            pltpu.make_async_copy(
                data_hbm.at[row], buf.at[sl, g], sem.at[sl, g]).start()

    # Prime the pipeline: the very first step issues its own gathers.
    @pl.when(step == 0)
    def _():
        issue(0, 0)

    # Prefetch next step's rows into the other slot BEFORE waiting on the
    # current slot (keeps G DMAs in flight across the step boundary and reads
    # SMEM scalars ahead of any .wait()).
    @pl.when(step + 1 < nsteps)
    def _():
        issue(step + 1, 1 - slot)

    # Wait on the current slot's DMAs.
    for g in range(G):
        pltpu.make_async_copy(
            data_hbm.at[0], buf.at[slot, g], sem.at[slot, g]).wait()

    # One dense, sublane-aligned store of the whole (G, D) tile.
    out_ref[...] = buf[slot]


def take_last_seqcat(data, lengths):
    N, D = data.shape
    B = lengths.shape[0]
    G = _GATHER_ROWS

    # positions[1:] - 1 == cumsum(lengths) - 1.  Wrap negatives (possible with
    # zero-length leading sequences) modulo N to match torch negative indexing.
    last_idx = jnp.mod(jnp.cumsum(lengths.astype(jnp.int32)) - 1, N).astype(jnp.int32)

    # Pad the index table / output to a multiple of G; padded rows gather row 0
    # and are sliced away afterwards.
    B_pad = pl.cdiv(B, G) * G
    if B_pad != B:
        last_idx = jnp.pad(last_idx, (0, B_pad - B))

    grid_spec = pltpu.PrefetchScalarGridSpec(
        num_scalar_prefetch=1,
        grid=(B_pad // G,),
        in_specs=[pl.BlockSpec(memory_space=pl.ANY)],          # data stays in HBM
        out_specs=pl.BlockSpec((G, D), lambda i, idx: (i, 0)),
        scratch_shapes=[
            pltpu.VMEM((2, G, D), data.dtype),                 # double buffer
            pltpu.SemaphoreType.DMA((2, G)),
        ],
    )
    out = pl.pallas_call(
        _gather_last_kernel,
        out_shape=jax.ShapeDtypeStruct((B_pad, D), data.dtype),
        grid_spec=grid_spec,
        compiler_params=pltpu.CompilerParams(
            # Cross-step double-buffering carries state -> sequential axis.
            dimension_semantics=("arbitrary",)),
    )(last_idx, data)
    return out[:B]


# ----------------------------------------------------------------------------
# TakeLast "module": dispatch mirrors the PyTorch forward.
# ----------------------------------------------------------------------------
class TakeLast:
    def __call__(self, t):
        if isinstance(t, tuple):  # (data, lengths) stands in for SequenceCat
            data, lengths = t
            return take_last_seqcat(data, lengths)
        return take_last_tensor(t)


if __name__ == "__main__":
    key = jax.random.PRNGKey(0)
    k1, k2, k3, k4 = jax.random.split(key, 4)

    module = TakeLast()

    # --- Tensor case: [T=8, B=2, D=32] ---------------------------------------
    T, B, D = 8, 2, 32
    t = jax.random.normal(k1, (T, B, D), dtype=jnp.float32)
    out_t = module(t)
    jax.block_until_ready(out_t)
    assert out_t.shape == (B, D)
    assert jnp.allclose(out_t, t[-1]), "tensor case mismatch"

    # --- Tensor case, 2-D input: [T=8, D=32] ----------------------------------
    t2 = jax.random.normal(k4, (T, D), dtype=jnp.float32)
    out_t2 = module(t2)
    jax.block_until_ready(out_t2)
    assert out_t2.shape == (D,)
    assert jnp.allclose(out_t2, t2[-1]), "tensor (2D) case mismatch"

    # --- SequenceCat case (B < G): lengths [5, 8, 3], D=32 --------------------
    lengths = jnp.array([5, 8, 3], dtype=jnp.int32)
    N = int(lengths.sum())
    data = jax.random.normal(k2, (N, D), dtype=jnp.float32)
    out_sc = module((data, lengths))
    jax.block_until_ready(out_sc)
    ref = data[jnp.cumsum(lengths) - 1]
    assert out_sc.shape == (lengths.shape[0], D)
    assert jnp.allclose(out_sc, ref), "SequenceCat case mismatch"

    # --- SequenceCat case (B > G, multi-step pipelined grid): 18 seqs, D=32 ---
    lengths2 = jnp.array([2, 5, 1, 4, 3, 6, 2, 1, 3, 4, 2, 2, 5, 1, 3, 2, 4, 1],
                         dtype=jnp.int32)
    N2 = int(lengths2.sum())
    data2 = jax.random.normal(k3, (N2, D), dtype=jnp.float32)
    out_sc2 = module((data2, lengths2))
    jax.block_until_ready(out_sc2)
    ref2 = data2[jnp.cumsum(lengths2) - 1]
    assert out_sc2.shape == (lengths2.shape[0], D)
    assert jnp.allclose(out_sc2, ref2), "SequenceCat (multi-step) case mismatch"

    print("KERNEL_OK")
</pallas_src>

<mosaic_0001>
module attributes {stable_mosaic.version = 11 : i64} {
  func.func @_take_last_tensor_kernel(%arg0: i32, %arg1: i32, %arg2: memref<1x2x32xf32, #tpu.memory_space<vmem>>, %arg3: memref<2x32xf32, #tpu.memory_space<vmem>>) attributes {dimension_semantics = [#tpu.dimension_semantics<parallel>, #tpu.dimension_semantics<parallel>], iteration_bounds = array<i64: 1, 1>, scalar_prefetch = 0 : i64, scratch_operands = 0 : i64, tpu.core_type = #tpu.core_type<tc>, window_params = [{transform_indices = @transform_0, window_bounds = array<i64: 1, 2, 32>}, {transform_indices = @transform_1, window_bounds = array<i64: 2, 32>}]} {
    %c0 = arith.constant 0 : index
    %c0_0 = arith.constant 0 : index
    %c0_1 = arith.constant 0 : index
    %0 = vector.load %arg2[%c0, %c0_0, %c0_1] : memref<1x2x32xf32, #tpu.memory_space<vmem>>, vector<1x2x32xf32>
    %1 = vector.shape_cast %0 : vector<1x2x32xf32> to vector<2x32xf32>
    %c0_2 = arith.constant 0 : index
    %c0_3 = arith.constant 0 : index
    %2 = vector.load %arg3[%c0_2, %c0_3] : memref<2x32xf32, #tpu.memory_space<vmem>>, vector<2x32xf32>
    tpu.vector_store %arg3[%c0_2, %c0_3], %1 {strides = array<i32>} : memref<2x32xf32, #tpu.memory_space<vmem>>, vector<2x32xf32>,
    return
  }
  func.func @transform_0(%arg0: i32, %arg1: i32) -> (i32, i32, i32) {
    %c7_i32 = arith.constant 7 : i32
    %c0_i32 = arith.constant 0 : i32
    return %c7_i32, %arg0, %arg1 : i32, i32, i32
  }
  func.func @transform_1(%arg0: i32, %arg1: i32) -> (i32, i32) {
    %c0_i32 = arith.constant 0 : i32
    return %arg0, %arg1 : i32, i32
  }
}

</mosaic_0001>

<llo_original>
// kernel: tpu_custom_call.1
$region0: #{tpu_custom_call.1}
  #allocation0 [shape = 'u32[]', space=smem, size = 0x4, offset = 0x4, fixed_abs, tag = 'smem constant byte address 0x4 - core index']
  #allocation1 [shape = 'u32[144,128]{1,0:T(1,128)}', space=vmem, size = 0x12000, scoped, tag = 'internal scratch']
  %s0 = inlined_call_operand.hbm [shape: f32[8,2,32], index: 0, kind: input, shape index: {}]
  %s1 = inlined_call_operand.hbm [shape: f32[2,32], index: 1, kind: output, shape index: {}]
  %s2 = sld [smem:[#allocation0]]
  $region18: #{tpu_custom_call.1} parent=0
    _
  %s4 = ssub.s32 1, %s2
  %s5 = scalar_select 0, %s4, %s2
  $region1: #{tpu_custom_call.1} parent=0
    #allocation2 [shape = 'u8[1024]{0}', space=vmem, size = 0x400, scoped, tag = 'input window, operand 0, single buffered']
    #allocation3 [shape = 's32[1]{0}', space=sflag, size = 0x4, scoped, tag = 'scoped memory for tpu_custom_call.1']
    #allocation4 [shape = 's32[1]{0}', space=sflag, size = 0x4, scoped, tag = 'scoped memory for tpu_custom_call.1']
    #allocation5 [shape = 'u8[1024]{0}', space=vmem, size = 0x400, scoped, tag = 'output window, operand 0, single buffered']
    %6 = vsyncpa [#allocation3], 0
    %7 = vsyncpa [#allocation4], 0
    // Predicated region
    $region2: #{tpu_custom_call.1} parent=1 // pred_check
      _
    $region3: #{tpu_custom_call.1} parent=1 // pred_check_branch
      %9 = sbr.rel (0) target = $region5
    $region4: #{tpu_custom_call.1} parent=1 // pred_region
      %s11 = ssub.s32 32, 32
      %12 = vsyncadd [#allocation3], %s11
      %s13 = scalar_lea.hbm %s0, 224
      %s15 = sshll.u32 [#allocation2], 4
      %s16 = int_to_ptr.vmem [resolvable:$true] %s15
      %18 = dma.hbm_to_vmem [thread:$0]  %s13, 32, %s16, [#allocation3]
    $region5: #{tpu_custom_call.1} parent=1 // pred_fallthru
      _
    // Predicated region
    $region6: #{tpu_custom_call.1} parent=1 // pred_check
      _
    $region7: #{tpu_custom_call.1} parent=1 // pred_check_branch
      %20 = sbr.rel (0) target = $region9
    $region8: #{tpu_custom_call.1} parent=1 // pred_region
      %21 = dma.done [#allocation3], 32
    $region9: #{tpu_custom_call.1} parent=1 // pred_fallthru
      _
    %v22 = vld [vmem:[#allocation2] sm:$0x3]
    %vm23 = vcmask 254976
    %24 = vst.msk [vmem:[#allocation5] sm:$0x3] %vm23, %v22
    // Predicated region
    $region10: #{tpu_custom_call.1} parent=1 // pred_check
      _
    $region11: #{tpu_custom_call.1} parent=1 // pred_check_branch
      %26 = sbr.rel (0) target = $region13
    $region12: #{tpu_custom_call.1} parent=1 // pred_region
      %s28 = ssub.s32 32, 32
      %29 = vsyncadd [#allocation4], %s28
      %s31 = sshll.u32 [#allocation5], 4
      %s32 = int_to_ptr.vmem [resolvable:$true] %s31
      %34 = dma.vmem_to_hbm [thread:$0]  %s32, 32, %s1, [#allocation4]
    $region13: #{tpu_custom_call.1} parent=1 // pred_fallthru
      _
    // Predicated region
    $region14: #{tpu_custom_call.1} parent=1 // pred_check
      _
    $region15: #{tpu_custom_call.1} parent=1 // pred_check_branch
      %36 = sbr.rel (0) target = $region17
    $region16: #{tpu_custom_call.1} parent=1 // pred_region
      %37 = dma.done [#allocation4], 32
    $region17: #{tpu_custom_call.1} parent=1 // pred_fallthru
      _
    %38 = vsyncpa [#allocation3], 1
    %39 = vsyncpa [#allocation4], 1

</llo_original>
